<compile_context>
chip_gen: v7x
topology: tpu7x:2x2x1
jax: 0.10.0
libtpu: 0.0.40
codegen_flags: <defaults>
</compile_context>

<pallas_src>
from types import SimpleNamespace

import jax
import jax.numpy as jnp
from jax.experimental import pallas as pl
from jax.experimental.pallas import tpu as pltpu


def trig_decoder_kernel(h_ref, w_ref, b_ref, out_ref):
    """Single MXU push: (tile_n, H) @ (H, 3T-1) + bias -> (tile_n, 3T-1).

    h_ref  : (tile_n, H)       flattened hidden-state rows
    w_ref  : (H, 3T-1)         concatenated, pre-transposed [W_tag^T | W_bio^T]
    b_ref  : (1, 3T-1)         concatenated bias (VMEM broadcast add)
    out_ref: (tile_n, 3T-1)    combined logits (split into heads in the wrapper)
    """
    out_ref[...] = (
        jnp.dot(h_ref[...], w_ref[...], preferred_element_type=jnp.float32)
        + b_ref[...]
    ).astype(out_ref.dtype)


def trig_decoder_logits(h_flat, w_cat_t, b_cat, *, max_tile_n=1024):
    """h_flat (N, H) f32 -> combined logits (N, 3T-1) f32 via one pallas_call."""
    N, H = h_flat.shape
    n_out = w_cat_t.shape[1]

    # Largest N-tile that comfortably fits VMEM (H=32 rows are tiny); only pad
    # and tile when N actually exceeds the tile, otherwise a single grid step.
    if N <= max_tile_n:
        tile_n, n_pad = N, N
    else:
        tile_n = max_tile_n
        n_pad = pl.cdiv(N, tile_n) * tile_n
        if n_pad != N:
            h_flat = jnp.pad(h_flat, ((0, n_pad - N), (0, 0)))

    logits = pl.pallas_call(
        trig_decoder_kernel,
        out_shape=jax.ShapeDtypeStruct((n_pad, n_out), jnp.float32),
        grid_spec=pltpu.PrefetchScalarGridSpec(
            num_scalar_prefetch=0,
            grid=(n_pad // tile_n,),
            in_specs=[
                pl.BlockSpec((tile_n, H), lambda i: (i, 0)),
                pl.BlockSpec((H, n_out), lambda i: (0, 0)),   # weights resident
                pl.BlockSpec((1, n_out), lambda i: (0, 0)),   # bias resident
            ],
            out_specs=pl.BlockSpec((tile_n, n_out), lambda i: (i, 0)),
        ),
        # N axis is embarrassingly parallel -> both TCs on v7x take half each.
        compiler_params=pltpu.CompilerParams(
            dimension_semantics=("parallel",),
        ),
    )(h_flat, w_cat_t, b_cat)
    return logits[:N]


class TrigDecoderPallas:
    """JAX/Pallas port of TrigDecoder (eval-mode forward)."""

    def __init__(self, config, key):
        self.config = config
        h_enc = 2 * config.lstm_hidden_dim if config.bilstm else config.lstm_hidden_dim
        T = config.tagset_size
        n_bio = 2 * T - 1
        k_wt, k_bt, k_wb, k_bb = jax.random.split(key, 4)
        bound = 1.0 / jnp.sqrt(jnp.float32(h_enc))
        # nn.Linear default init ~ U(-1/sqrt(fan_in), 1/sqrt(fan_in)); store W^T.
        self.w_tag_t = jax.random.uniform(k_wt, (h_enc, T), jnp.float32, -bound, bound)
        self.b_tag = jax.random.uniform(k_bt, (T,), jnp.float32, -bound, bound)
        self.w_bio_t = jax.random.uniform(k_wb, (h_enc, n_bio), jnp.float32, -bound, bound)
        self.b_bio = jax.random.uniform(k_bb, (n_bio,), jnp.float32, -bound, bound)
        # Concatenate along the output axis -> one MXU push, one output DMA.
        self.w_cat_t = jnp.concatenate([self.w_tag_t, self.w_bio_t], axis=1)   # (H, 3T-1)
        self.b_cat = jnp.concatenate([self.b_tag, self.b_bio]).reshape(1, -1)  # (1, 3T-1)
        self.tagset_size = T

    def __call__(self, hidden_in, batch_sent_lens=None):
        # batch_sent_lens is unused in TrigDecoder.forward (kept for API parity).
        B, S, H = hidden_in.shape
        h_flat = hidden_in.reshape(B * S, H)  # torch .view(B*S, -1); free bitcast
        logits = trig_decoder_logits(h_flat, self.w_cat_t, self.b_cat)
        T = self.tagset_size
        # Plain XLA slices outside the kernel (fuse into downstream consumers).
        return logits[:, :T], logits[:, T:]


if __name__ == "__main__":
    config = SimpleNamespace(
        random_seed=0, bilstm=False, gpu=False,
        lstm_hidden_dim=32, tagset_size=5,
    )

    key = jax.random.PRNGKey(0)
    k_params, k_hidden = jax.random.split(key)

    B, S = 2, 8
    model = TrigDecoderPallas(config, k_params)

    hidden_in = jax.random.normal(k_hidden, (B, S, config.lstm_hidden_dim), jnp.float32)
    batch_sent_lens = jnp.array([8, 5], dtype=jnp.int32)

    tag_space, bio_tag_space = model(hidden_in, batch_sent_lens)
    tag_space = jax.block_until_ready(tag_space)
    bio_tag_space = jax.block_until_ready(bio_tag_space)

    T = config.tagset_size
    assert tag_space.shape == (B * S, T), tag_space.shape
    assert bio_tag_space.shape == (B * S, 2 * T - 1), bio_tag_space.shape

    # Pure-JAX reference check against the two per-head Linears (same math as torch).
    h_flat = hidden_in.reshape(B * S, -1)
    ref_tag = h_flat @ model.w_tag_t + model.b_tag
    ref_bio = h_flat @ model.w_bio_t + model.b_bio
    assert bool(jnp.allclose(tag_space, ref_tag, atol=1e-5, rtol=1e-5))
    assert bool(jnp.allclose(bio_tag_space, ref_bio, atol=1e-5, rtol=1e-5))

    print("KERNEL_OK")
</pallas_src>

<mosaic_0001>
module attributes {stable_mosaic.version = 11 : i64} {
  func.func @trig_decoder_kernel(%arg0: i32, %arg1: memref<16x32xf32, #tpu.memory_space<vmem>>, %arg2: memref<32x14xf32, #tpu.memory_space<vmem>>, %arg3: memref<1x14xf32, #tpu.memory_space<vmem>>, %arg4: memref<16x14xf32, #tpu.memory_space<vmem>>) attributes {dimension_semantics = [#tpu.dimension_semantics<parallel>], iteration_bounds = array<i64: 1>, scalar_prefetch = 0 : i64, scratch_operands = 0 : i64, tpu.core_type = #tpu.core_type<tc>, window_params = [{transform_indices = @transform_0, window_bounds = array<i64: 16, 32>}, {pipeline_mode = #tpu.pipeline_mode<synchronous>, transform_indices = @transform_1, window_bounds = array<i64: 32, 14>}, {pipeline_mode = #tpu.pipeline_mode<synchronous>, transform_indices = @transform_2, window_bounds = array<i64: 1, 14>}, {transform_indices = @transform_3, window_bounds = array<i64: 16, 14>}]} {
    %c0 = arith.constant 0 : index
    %c0_0 = arith.constant 0 : index
    %0 = vector.load %arg1[%c0, %c0_0] : memref<16x32xf32, #tpu.memory_space<vmem>>, vector<16x32xf32>
    %c0_1 = arith.constant 0 : index
    %c0_2 = arith.constant 0 : index
    %1 = vector.load %arg2[%c0_1, %c0_2] : memref<32x14xf32, #tpu.memory_space<vmem>>, vector<32x14xf32>
    %cst = arith.constant dense<0.000000e+00> : vector<16x14xf32>
    %2 = tpu.matmul %0, %1, %cst {dimension_numbers = #tpu.dot_dimension_numbers<[1], [0], [0], [1], [0, 0, 1, 1], [], []>} : vector<16x32xf32>, vector<32x14xf32>, vector<16x14xf32> -> vector<16x14xf32>
    %c0_3 = arith.constant 0 : index
    %c0_4 = arith.constant 0 : index
    %3 = vector.load %arg3[%c0_3, %c0_4] : memref<1x14xf32, #tpu.memory_space<vmem>>, vector<1x14xf32>
    %4 = vector.broadcast %3 : vector<1x14xf32> to vector<16x14xf32>
    %5 = arith.addf %2, %4 : vector<16x14xf32>
    %c0_5 = arith.constant 0 : index
    %c0_6 = arith.constant 0 : index
    %6 = vector.load %arg4[%c0_5, %c0_6] : memref<16x14xf32, #tpu.memory_space<vmem>>, vector<16x14xf32>
    tpu.vector_store %arg4[%c0_5, %c0_6], %5 {strides = array<i32>} : memref<16x14xf32, #tpu.memory_space<vmem>>, vector<16x14xf32>,
    return
  }
  func.func @transform_0(%arg0: i32) -> (i32, i32) {
    %c0_i32 = arith.constant 0 : i32
    %c0_i32_0 = arith.constant 0 : i32
    return %arg0, %c0_i32 : i32, i32
  }
  func.func @transform_1(%arg0: i32) -> (i32, i32) {
    %c0_i32 = arith.constant 0 : i32
    %c0_i32_0 = arith.constant 0 : i32
    %c0_i32_1 = arith.constant 0 : i32
    return %c0_i32, %c0_i32_0 : i32, i32
  }
  func.func @transform_2(%arg0: i32) -> (i32, i32) {
    %c0_i32 = arith.constant 0 : i32
    %c0_i32_0 = arith.constant 0 : i32
    %c0_i32_1 = arith.constant 0 : i32
    return %c0_i32, %c0_i32_0 : i32, i32
  }
  func.func @transform_3(%arg0: i32) -> (i32, i32) {
    %c0_i32 = arith.constant 0 : i32
    %c0_i32_0 = arith.constant 0 : i32
    return %arg0, %c0_i32 : i32, i32
  }
}

</mosaic_0001>

<llo_original>
// kernel: tpu_custom_call.1
$region0: #{tpu_custom_call.1}
  #allocation0 [shape = 'u32[]', space=smem, size = 0x4, offset = 0x4, fixed_abs, tag = 'smem constant byte address 0x4 - core index']
  #allocation1 [shape = 'u32[144,128]{1,0:T(1,128)}', space=vmem, size = 0x12000, scoped, tag = 'internal scratch']
  %s0 = inlined_call_operand.vmem [shape: f32[16,32], index: 0, kind: input, shape index: {}]
  %s1 = inlined_call_operand.vmem [shape: f32[32,14], index: 1, kind: input, shape index: {}]
  %s2 = inlined_call_operand.vmem [shape: f32[1,14], index: 2, kind: input, shape index: {}]
  %s3 = inlined_call_operand.hbm [shape: f32[16,14], index: 3, kind: output, shape index: {}]
  %s4 = sld [smem:[#allocation0]]
  $region22: #{tpu_custom_call.1} parent=0
    _
  %s6 = ssub.s32 1, %s4
  %s7 = scalar_select 0, %s6, %s4
  $region1: #{tpu_custom_call.1} parent=0
    #allocation2 [shape = 'u8[8192]{0}', space=vmem, size = 0x2000, scoped, tag = 'output window, operand 0, single buffered']
    #allocation3 [shape = 's32[1]{0}', space=sflag, size = 0x4, scoped, tag = 'scoped memory for tpu_custom_call.1']
    %8 = vsyncpa [#allocation3], 0
    // Predicated region
    $region2: #{tpu_custom_call.1} parent=1 // pred_check
      _
    $region3: #{tpu_custom_call.1} parent=1 // pred_check_branch
      %10 = sbr.rel (0) target = $region5
    $region4: #{tpu_custom_call.1} parent=1 // pred_region
      _
    $region5: #{tpu_custom_call.1} parent=1 // pred_fallthru
      _
    // Predicated region
    $region6: #{tpu_custom_call.1} parent=1 // pred_check
      _
    $region7: #{tpu_custom_call.1} parent=1 // pred_check_branch
      %12 = sbr.rel (0) target = $region9
    $region8: #{tpu_custom_call.1} parent=1 // pred_region
      _
    $region9: #{tpu_custom_call.1} parent=1 // pred_fallthru
      _
    // Predicated region
    $region10: #{tpu_custom_call.1} parent=1 // pred_check
      _
    $region11: #{tpu_custom_call.1} parent=1 // pred_check_branch
      %14 = sbr.rel (0) target = $region13
    $region12: #{tpu_custom_call.1} parent=1 // pred_region
      _
    $region13: #{tpu_custom_call.1} parent=1 // pred_fallthru
      _
    %v15 = vld [vmem:[%s0] sm:$0xff]
    %v16 = vld [vmem:[%s0 + $0x8] sm:$0xff]
    %v17 = vld [vmem:[%s1] sm:$0xff]
    %v18 = vld [vmem:[%s1 + $0x8] sm:$0xff]
    %v19 = vld [vmem:[%s1 + $0x10] sm:$0xff]
    %v20 = vld [vmem:[%s1 + $0x18] sm:$0xff]
    %v21 = vld [vmem:[%s2] sm:$0x1]
    %v23 = vlaneseq
    %v24 = vshrl.u32 %v23, 7
    %v25 = vsub.s32 0, %v24
    %v26 = vrot.slane %v21, %v25
    %vm28 = vcmask 261120
    %v30 = vsel %vm28, %v15, 0
    %v33 = vsel %vm28, %v16, 0
    %35 = vmatprep.subr.mxu0 0.0
    %36 = vmatpush1.msra.mxu0 %v17
    %37 = vmatprep.subr.mxu0 0.0
    %38 = vmatpush1.msra.mxu0 %v18
    %39 = vmatprep.subr.mxu0 0.0
    %40 = vmatpush1.msra.mxu0 %v19
    %41 = vmatprep.subr.mxu0 0.0
    %42 = vmatpush1.msra.mxu0 %v20
    %43 = vmatprep.subr.mxu0 0.0
    %44 = vmatpush1.msra.mxu0 0.0
    %45 = vmatprep.subr.mxu0 0.0
    %46 = vmatpush1.msra.mxu0 0.0
    %47 = vmatprep.subr.mxu0 0.0
    %48 = vmatpush1.msra.mxu0 0.0
    %49 = vmatprep.subr.mxu0 0.0
    %50 = vmatpush1.msra.mxu0 0.0
    %51 = vmatprep.subr.mxu0 0.0
    %52 = vmatpush1.msra.mxu0 0.0
    %53 = vmatprep.subr.mxu0 0.0
    %54 = vmatpush1.msra.mxu0 0.0
    %55 = vmatprep.subr.mxu0 0.0
    %56 = vmatpush1.msra.mxu0 0.0
    %57 = vmatprep.subr.mxu0 0.0
    %58 = vmatpush1.msra.mxu0 0.0
    %59 = vmatprep.subr.mxu0 0.0
    %60 = vmatpush1.msra.mxu0 0.0
    %61 = vmatprep.subr.mxu0 0.0
    %62 = vmatpush1.msra.mxu0 0.0
    %63 = vmatprep.subr.mxu0 0.0
    %64 = vmatpush1.msra.mxu0 0.0
    %65 = vmatprep.subr.mxu0 0.0
    %66 = vmatpush1.msra.mxu0 0.0
    %67 = vmatprep.subr.mxu0 0.0
    %68 = vmatpush1.msra.mxu0 0.0
    %69 = vmatprep.subr.mxu0 0.0
    %70 = vmatpush1.msra.mxu0 0.0
    %71 = vmatprep.subr.mxu0 0.0
    %72 = vmatpush1.msra.mxu0 0.0
    %73 = vmatprep.subr.mxu0 0.0
    %74 = vmatpush1.msra.mxu0 0.0
    %75 = vmatprep.subr.mxu0 0.0
    %76 = vmatpush1.msra.mxu0 0.0
    %77 = vmatprep.subr.mxu0 0.0
    %78 = vmatpush1.msra.mxu0 0.0
    %79 = vmatprep.subr.mxu0 0.0
    %80 = vmatpush1.msra.mxu0 0.0
    %81 = vmatprep.subr.mxu0 0.0
    %82 = vmatpush1.msra.mxu0 0.0
    %83 = vmatprep.subr.mxu0 0.0
    %84 = vmatpush1.msra.mxu0 0.0
    %85 = vmatprep.subr.mxu0 0.0
    %86 = vmatpush1.msra.mxu0 0.0
    %87 = vmatprep.subr.mxu0 0.0
    %88 = vmatpush1.msra.mxu0 0.0
    %89 = vmatprep.subr.mxu0 0.0
    %90 = vmatpush1.msra.mxu0 0.0
    %91 = vmatprep.subr.mxu0 0.0
    %92 = vmatpush1.msra.mxu0 0.0
    %93 = vmatprep.subr.mxu0 0.0
    %94 = vmatpush1.msra.mxu0 0.0
    %95 = vmatprep.subr.mxu0 0.0
    %96 = vmatpush1.msra.mxu0 0.0
    %97 = vmatprep.subr.mxu0 0.0
    %98 = vmatpush1.msra.mxu0 0.0
    %99 = vmatprep.mubr.f32.mxu0 0.0
    %100 = vmatmul.mubr.f32.gmra.mrb[0].mxu0 %v30
    %v101 = vpop.f32.mrb[0].mxu0
    %v102 = vadd.f32 %v26, %v101
    %v103 = vpop.f32.mrb[0].mxu0
    %104 = vmatprep.mubr.f32.mxu0 0.0
    %105 = vmatmul.mubr.f32.gmra.mrb[0].mxu0 %v33
    %v106 = vpop.f32.mrb[0].mxu0
    %v107 = vadd.f32 %v26, %v106
    %v108 = vpop.f32.mrb[0].mxu0
    %109 = vdwg.mxu0
    %vm110 = vcmask 113664
    %111 = vst.msk [vmem:[#allocation2] sm:$0xff] %vm110, %v102
    %112 = vst.msk [vmem:[#allocation2 + $0x8] sm:$0xff] %vm110, %v107
    // Predicated region
    $region14: #{tpu_custom_call.1} parent=1 // pred_check
      _
    $region15: #{tpu_custom_call.1} parent=1 // pred_check_branch
      %114 = sbr.rel (0) target = $region17
    $region16: #{tpu_custom_call.1} parent=1 // pred_region
      %s116 = ssub.s32 256, 256
      %117 = vsyncadd [#allocation3], %s116
      %s118 = sshll.u32 [#allocation2], 4
      %s119 = int_to_ptr.vmem [resolvable:$true] %s118
      %124 = dma.vmem_to_hbm [thread:$0]  %s119, 256, %s3, [#allocation3], 128, 128, 8
    $region17: #{tpu_custom_call.1} parent=1 // pred_fallthru
      _
    // Predicated region
    $region18: #{tpu_custom_call.1} parent=1 // pred_check
      _
    $region19: #{tpu_custom_call.1} parent=1 // pred_check_branch
      %126 = sbr.rel (0) target = $region21
    $region20: #{tpu_custom_call.1} parent=1 // pred_region
      %127 = dma.done [#allocation3], 256
    $region21: #{tpu_custom_call.1} parent=1 // pred_fallthru
      _
    %128 = vsyncpa [#allocation3], 1

</llo_original>
